<compile_context>
chip_gen: v7x
topology: tpu7x:2x2x1
jax: 0.10.0
libtpu: 0.0.40
codegen_flags: <defaults>
</compile_context>

<pallas_src>
import functools
import math

import jax
import jax.numpy as jnp
from jax.experimental import pallas as pl
from jax.experimental.pallas import tpu as pltpu


def _eca_kernel(m_ref, x_ref, o_ref, *, num_views, fxy):
    """One row-tile of the (NT, V*FXY) permuted slab.

    m_ref : (V*FXY, V) f32  - pooling (1/FXY) + Conv1d taps folded into one matrix
    x_ref : (TB, V*FXY)     - activations, permuted (v, f, xy) column order
    o_ref : (TB, V*FXY)     - gated activations, same layout
    """
    x = x_ref[...]                                            # (TB, D), native dtype

    # AdaptiveAvgPool2d(1) + Conv1d(1,1,k,pad=k//2) as a single MXU matmul:
    #   y[:, u] = sum_{c,l} x[:, c*FXY + l] * w[c-u+pad] / FXY
    y = jnp.dot(x, m_ref[...].astype(x.dtype),
                preferred_element_type=jnp.float32)           # (TB, V) f32
    attn = jax.nn.sigmoid(y)                                  # (TB, V) f32 (EUP)

    # Gate each view's FXY lanes.  Per-view segment multiply/store avoids any
    # full-tile gate temporary; the (TB, 1) lane-broadcast is the standard
    # softmax-style row scale.  Multiply in f32, cast on store.
    for v in range(num_views):
        lo = v * fxy
        seg = x[:, lo:lo + fxy].astype(jnp.float32)
        o_ref[:, lo:lo + fxy] = (seg * attn[:, v:v + 1]).astype(o_ref.dtype)


def _build_pool_conv_matrix(conv_weight, num_views, fxy):
    """(V*FXY, V) matrix folding AdaptiveAvgPool2d(1) and the Conv1d taps."""
    k = conv_weight.shape[-1]
    pad = k // 2
    w = conv_weight.reshape(k).astype(jnp.float32)
    c = jnp.arange(num_views)
    # y[u] = sum_c w[c - u + pad] * pooled[c]   (for 0 <= c - u + pad < k)
    tap_idx = c[:, None] - c[None, :] + pad                       # (V, V)
    valid = (tap_idx >= 0) & (tap_idx < k)
    tap = jnp.where(valid, w[jnp.clip(tap_idx, 0, k - 1)], 0.0)   # (V, V)
    tap = tap / float(fxy)                                        # fold the mean
    return jnp.repeat(tap, fxy, axis=0)                           # (V*FXY, V)


@jax.jit
def efficient_channel_attention(x, conv_weight):
    """x: (N, T, F, XY, V); conv_weight: (1, 1, k). Returns (N, T, V, F, XY)."""
    N, T, F, XY, V = x.shape
    FXY = F * XY
    D = V * FXY
    NT = N * T
    itemsize = x.dtype.itemsize

    m = _build_pool_conv_matrix(conv_weight, V, FXY)

    # Lane-dense permuted view (NT, V*F*XY).  Left to XLA; allow_input_fusion
    # lets it fuse into the pallas_call operand when the compiler supports it.
    # TODO(synk): verify with xprof whether this transpose fuses or materializes.
    x2 = jnp.transpose(x, (0, 1, 4, 2, 3)).reshape(NT, D)

    # ---- tile sizing --------------------------------------------------------
    # Sublane multiple for the second-minor block dim: 8 (f32) / 16 (bf16) / 32 (int8).
    sub = max(8, 32 // itemsize)
    row_bytes = D * itemsize
    # ~4 MiB tiles: amortizes the ~0.35us per-grid-step overhead against v7x's
    # 3.2 TB/s HBM; double-buffered in+out tiles (~16 MiB) + small temps stay
    # well inside every generation's scoped-VMEM budget chosen below.
    target_rows = max(sub, ((4 * 1024 * 1024) // row_bytes // sub) * sub)
    if NT <= sub:
        tb = NT                                   # single full-extent block
    else:
        # Keep at least 2 grid steps so dual-TensorCore parts (v7x) shard work.
        half = -(-NT // 2)
        half = -(-half // sub) * sub
        tb = max(sub, min(target_rows, half))
    grid = (pl.cdiv(NT, tb),)

    # ---- generation-aware scoped-VMEM limit ---------------------------------
    try:
        vmem_cap = int(pltpu.get_tpu_info().vmem_capacity_bytes)
    except Exception:
        vmem_cap = 64 * 1024 * 1024
    # ~38 MiB on v7x (64 MiB/core), ~77 MiB on v5e/v6e (128 MiB).
    vmem_limit = max(32 * 1024 * 1024,
                     min(int(vmem_cap * 0.6), 96 * 1024 * 1024))

    kernel = functools.partial(_eca_kernel, num_views=V, fxy=FXY)

    cost = pl.CostEstimate(
        flops=2 * NT * D * V + 2 * NT * D,        # pool/conv matmul + gating
        transcendentals=NT * V,                   # sigmoid
        bytes_accessed=2 * NT * D * itemsize + D * V * 4,
    )

    out2 = pl.pallas_call(
        kernel,
        out_shape=jax.ShapeDtypeStruct((NT, D), x.dtype),
        grid=grid,
        in_specs=[
            pl.BlockSpec((D, V), lambda i: (0, 0)),     # pool+conv matrix (resident)
            pl.BlockSpec((tb, D), lambda i: (i, 0)),    # activation row-tile
        ],
        out_specs=pl.BlockSpec((tb, D), lambda i: (i, 0)),
        compiler_params=pltpu.CompilerParams(
            dimension_semantics=("parallel",),
            vmem_limit_bytes=vmem_limit,
            allow_input_fusion=[False, True],
        ),
        cost_estimate=cost,
    )(m, x2)

    return out2.reshape(N, T, V, F, XY)


def _eca_reference(x, conv_weight):
    """Pure-JAX reference mirroring the PyTorch forward."""
    N, T, F, XY, V = x.shape
    k = conv_weight.shape[-1]
    pad = k // 2
    w = conv_weight.reshape(k)
    xp = jnp.transpose(x, (0, 1, 4, 2, 3))                    # (N, T, V, F, XY)
    pooled = jnp.mean(xp, axis=(3, 4))                        # (N, T, V)
    p = jnp.pad(pooled, ((0, 0), (0, 0), (pad, pad)))
    y = sum(w[j] * p[:, :, j:j + V] for j in range(k))        # (N, T, V)
    attn = jax.nn.sigmoid(y)
    return xp * attn[..., None, None]


if __name__ == "__main__":
    # Module hyperparameters (defaults): gamma=2, b=1, num_views=8  ->  k = 3
    gamma, b, num_views = 2, 1, 8
    t = int(abs((math.log(num_views, 2) + b) / gamma))
    k = t if t % 2 else t + 1

    # Small shapes consistent with forward: x is (N, T, F, XY, V), V == num_views.
    N, T, F, XY, V = 2, 3, 4, 16, num_views

    key = jax.random.PRNGKey(0)
    kx, kw = jax.random.split(key)
    x = jax.random.normal(kx, (N, T, F, XY, V), dtype=jnp.float32)
    # Deterministic synthetic Conv1d weight, shape (out_ch=1, in_ch=1, k).
    conv_weight = jax.random.normal(kw, (1, 1, k), dtype=jnp.float32) * 0.5

    out = jax.block_until_ready(efficient_channel_attention(x, conv_weight))
    ref = _eca_reference(x, conv_weight)

    assert out.shape == (N, T, V, F, XY), out.shape
    # Pool+conv runs on the MXU (default matmul precision may use bf16 input
    # passes), so the attention weights carry ~1e-4-level error vs the pure-f32
    # reference; the gating multiply itself is exact f32.
    assert jnp.allclose(out, ref, atol=2e-3, rtol=2e-3), float(
        jnp.max(jnp.abs(out - ref)))

    print("KERNEL_OK")
</pallas_src>

<mosaic_0001>
module attributes {stable_mosaic.version = 11 : i64} {
  func.func @_eca_kernel(%arg0: i32, %arg1: memref<512x8xf32, #tpu.memory_space<vmem>>, %arg2: memref<6x512xf32, #tpu.memory_space<vmem>>, %arg3: memref<6x512xf32, #tpu.memory_space<vmem>>) attributes {dimension_semantics = [#tpu.dimension_semantics<parallel>], iteration_bounds = array<i64: 1>, scalar_prefetch = 0 : i64, scratch_operands = 0 : i64, tpu.core_type = #tpu.core_type<tc>, window_params = [{pipeline_mode = #tpu.pipeline_mode<synchronous>, transform_indices = @transform_0, window_bounds = array<i64: 512, 8>}, {transform_indices = @transform_1, window_bounds = array<i64: 6, 512>}, {transform_indices = @transform_2, window_bounds = array<i64: 6, 512>}]} {
    %c0 = arith.constant 0 : index
    %c0_0 = arith.constant 0 : index
    %0 = vector.load %arg2[%c0, %c0_0] : memref<6x512xf32, #tpu.memory_space<vmem>>, vector<6x512xf32>
    %c0_1 = arith.constant 0 : index
    %c0_2 = arith.constant 0 : index
    %1 = vector.load %arg1[%c0_1, %c0_2] : memref<512x8xf32, #tpu.memory_space<vmem>>, vector<512x8xf32>
    %cst = arith.constant dense<0.000000e+00> : vector<6x8xf32>
    %2 = tpu.matmul %0, %1, %cst {dimension_numbers = #tpu.dot_dimension_numbers<[1], [0], [0], [1], [0, 0, 1, 1], [], []>} : vector<6x512xf32>, vector<512x8xf32>, vector<6x8xf32> -> vector<6x8xf32>
    %3 = arith.negf %2 : vector<6x8xf32>
    %4 = math.exp %3 : vector<6x8xf32>
    %cst_3 = arith.constant 1.000000e+00 : f32
    %5 = vector.broadcast %cst_3 : f32 to vector<6x8xf32>
    %6 = arith.addf %5, %4 : vector<6x8xf32>
    %7 = arith.divf %5, %6 : vector<6x8xf32>
    %8 = vector.extract_strided_slice %0 {offsets = [0, 0], sizes = [6, 64], strides = [1, 1]} : vector<6x512xf32> to vector<6x64xf32>
    %9 = vector.extract_strided_slice %7 {offsets = [0, 0], sizes = [6, 1], strides = [1, 1]} : vector<6x8xf32> to vector<6x1xf32>
    %10 = vector.broadcast %9 : vector<6x1xf32> to vector<6x64xf32>
    %11 = arith.mulf %8, %10 : vector<6x64xf32>
    %c0_4 = arith.constant 0 : index
    %c0_5 = arith.constant 0 : index
    %12 = vector.load %arg3[%c0_4, %c0_5] : memref<6x512xf32, #tpu.memory_space<vmem>>, vector<6x64xf32>
    tpu.vector_store %arg3[%c0_4, %c0_5], %11 {strides = array<i32>} : memref<6x512xf32, #tpu.memory_space<vmem>>, vector<6x64xf32>,
    %13 = vector.extract_strided_slice %0 {offsets = [0, 64], sizes = [6, 64], strides = [1, 1]} : vector<6x512xf32> to vector<6x64xf32>
    %14 = vector.extract_strided_slice %7 {offsets = [0, 1], sizes = [6, 1], strides = [1, 1]} : vector<6x8xf32> to vector<6x1xf32>
    %15 = vector.broadcast %14 : vector<6x1xf32> to vector<6x64xf32>
    %16 = arith.mulf %13, %15 : vector<6x64xf32>
    %c0_6 = arith.constant 0 : index
    %c64 = arith.constant 64 : index
    %17 = vector.load %arg3[%c0_6, %c64] : memref<6x512xf32, #tpu.memory_space<vmem>>, vector<6x64xf32>
    tpu.vector_store %arg3[%c0_6, %c64], %16 {strides = array<i32>} : memref<6x512xf32, #tpu.memory_space<vmem>>, vector<6x64xf32>,
    %18 = vector.extract_strided_slice %0 {offsets = [0, 128], sizes = [6, 64], strides = [1, 1]} : vector<6x512xf32> to vector<6x64xf32>
    %19 = vector.extract_strided_slice %7 {offsets = [0, 2], sizes = [6, 1], strides = [1, 1]} : vector<6x8xf32> to vector<6x1xf32>
    %20 = vector.broadcast %19 : vector<6x1xf32> to vector<6x64xf32>
    %21 = arith.mulf %18, %20 : vector<6x64xf32>
    %c0_7 = arith.constant 0 : index
    %c128 = arith.constant 128 : index
    %22 = vector.load %arg3[%c0_7, %c128] : memref<6x512xf32, #tpu.memory_space<vmem>>, vector<6x64xf32>
    tpu.vector_store %arg3[%c0_7, %c128], %21 {strides = array<i32>} : memref<6x512xf32, #tpu.memory_space<vmem>>, vector<6x64xf32>,
    %23 = vector.extract_strided_slice %0 {offsets = [0, 192], sizes = [6, 64], strides = [1, 1]} : vector<6x512xf32> to vector<6x64xf32>
    %24 = vector.extract_strided_slice %7 {offsets = [0, 3], sizes = [6, 1], strides = [1, 1]} : vector<6x8xf32> to vector<6x1xf32>
    %25 = vector.broadcast %24 : vector<6x1xf32> to vector<6x64xf32>
    %26 = arith.mulf %23, %25 : vector<6x64xf32>
    %c0_8 = arith.constant 0 : index
    %c192 = arith.constant 192 : index
    %27 = vector.load %arg3[%c0_8, %c192] : memref<6x512xf32, #tpu.memory_space<vmem>>, vector<6x64xf32>
    tpu.vector_store %arg3[%c0_8, %c192], %26 {strides = array<i32>} : memref<6x512xf32, #tpu.memory_space<vmem>>, vector<6x64xf32>,
    %28 = vector.extract_strided_slice %0 {offsets = [0, 256], sizes = [6, 64], strides = [1, 1]} : vector<6x512xf32> to vector<6x64xf32>
    %29 = vector.extract_strided_slice %7 {offsets = [0, 4], sizes = [6, 1], strides = [1, 1]} : vector<6x8xf32> to vector<6x1xf32>
    %30 = vector.broadcast %29 : vector<6x1xf32> to vector<6x64xf32>
    %31 = arith.mulf %28, %30 : vector<6x64xf32>
    %c0_9 = arith.constant 0 : index
    %c256 = arith.constant 256 : index
    %32 = vector.load %arg3[%c0_9, %c256] : memref<6x512xf32, #tpu.memory_space<vmem>>, vector<6x64xf32>
    tpu.vector_store %arg3[%c0_9, %c256], %31 {strides = array<i32>} : memref<6x512xf32, #tpu.memory_space<vmem>>, vector<6x64xf32>,
    %33 = vector.extract_strided_slice %0 {offsets = [0, 320], sizes = [6, 64], strides = [1, 1]} : vector<6x512xf32> to vector<6x64xf32>
    %34 = vector.extract_strided_slice %7 {offsets = [0, 5], sizes = [6, 1], strides = [1, 1]} : vector<6x8xf32> to vector<6x1xf32>
    %35 = vector.broadcast %34 : vector<6x1xf32> to vector<6x64xf32>
    %36 = arith.mulf %33, %35 : vector<6x64xf32>
    %c0_10 = arith.constant 0 : index
    %c320 = arith.constant 320 : index
    %37 = vector.load %arg3[%c0_10, %c320] : memref<6x512xf32, #tpu.memory_space<vmem>>, vector<6x64xf32>
    tpu.vector_store %arg3[%c0_10, %c320], %36 {strides = array<i32>} : memref<6x512xf32, #tpu.memory_space<vmem>>, vector<6x64xf32>,
    %38 = vector.extract_strided_slice %0 {offsets = [0, 384], sizes = [6, 64], strides = [1, 1]} : vector<6x512xf32> to vector<6x64xf32>
    %39 = vector.extract_strided_slice %7 {offsets = [0, 6], sizes = [6, 1], strides = [1, 1]} : vector<6x8xf32> to vector<6x1xf32>
    %40 = vector.broadcast %39 : vector<6x1xf32> to vector<6x64xf32>
    %41 = arith.mulf %38, %40 : vector<6x64xf32>
    %c0_11 = arith.constant 0 : index
    %c384 = arith.constant 384 : index
    %42 = vector.load %arg3[%c0_11, %c384] : memref<6x512xf32, #tpu.memory_space<vmem>>, vector<6x64xf32>
    tpu.vector_store %arg3[%c0_11, %c384], %41 {strides = array<i32>} : memref<6x512xf32, #tpu.memory_space<vmem>>, vector<6x64xf32>,
    %43 = vector.extract_strided_slice %0 {offsets = [0, 448], sizes = [6, 64], strides = [1, 1]} : vector<6x512xf32> to vector<6x64xf32>
    %44 = vector.extract_strided_slice %7 {offsets = [0, 7], sizes = [6, 1], strides = [1, 1]} : vector<6x8xf32> to vector<6x1xf32>
    %45 = vector.broadcast %44 : vector<6x1xf32> to vector<6x64xf32>
    %46 = arith.mulf %43, %45 : vector<6x64xf32>
    %c0_12 = arith.constant 0 : index
    %c448 = arith.constant 448 : index
    %47 = vector.load %arg3[%c0_12, %c448] : memref<6x512xf32, #tpu.memory_space<vmem>>, vector<6x64xf32>
    tpu.vector_store %arg3[%c0_12, %c448], %46 {strides = array<i32>} : memref<6x512xf32, #tpu.memory_space<vmem>>, vector<6x64xf32>,
    return
  }
  func.func @transform_0(%arg0: i32) -> (i32, i32) {
    %c0_i32 = arith.constant 0 : i32
    %c0_i32_0 = arith.constant 0 : i32
    %c0_i32_1 = arith.constant 0 : i32
    return %c0_i32, %c0_i32_0 : i32, i32
  }
  func.func @transform_1(%arg0: i32) -> (i32, i32) {
    %c0_i32 = arith.constant 0 : i32
    %c0_i32_0 = arith.constant 0 : i32
    return %arg0, %c0_i32 : i32, i32
  }
  func.func @transform_2(%arg0: i32) -> (i32, i32) {
    %c0_i32 = arith.constant 0 : i32
    %c0_i32_0 = arith.constant 0 : i32
    return %arg0, %c0_i32 : i32, i32
  }
}

</mosaic_0001>

<llo_original>
// kernel: efficient_channel_attention.1
$region0: #{efficient_channel_attention.1}
  #allocation0 [shape = 'u32[]', space=smem, size = 0x4, offset = 0x4, fixed_abs, tag = 'smem constant byte address 0x4 - core index']
  #allocation1 [shape = 'u32[144,128]{1,0:T(1,128)}', space=vmem, size = 0x12000, scoped, tag = 'internal scratch']
  %s0 = inlined_call_operand.vmem [shape: f32[512,8], index: 0, kind: input, shape index: {}]
  %s1 = inlined_call_operand.vmem [shape: f32[6,512], index: 1, kind: input, shape index: {}]
  %s2 = inlined_call_operand.vmem [shape: f32[6,512], index: 2, kind: output, shape index: {}]
  %s3 = sld [smem:[#allocation0]]
  $region18: #{efficient_channel_attention.1} parent=0
    _
  %s5 = ssub.s32 1, %s3
  %s6 = scalar_select 0, %s5, %s3
  // Predicated region
  $region2: #{efficient_channel_attention.1} parent=0 // pred_check
    _
  $region3: #{efficient_channel_attention.1} parent=0 // pred_check_branch
    %8 = sbr.rel (0) target = $region5
  $region4: #{efficient_channel_attention.1} parent=0 // pred_region
    _
  $region5: #{efficient_channel_attention.1} parent=0 // pred_fallthru
    _
  // Predicated region
  $region6: #{efficient_channel_attention.1} parent=0 // pred_check
    _
  $region7: #{efficient_channel_attention.1} parent=0 // pred_check_branch
    %10 = sbr.rel (0) target = $region9
  $region8: #{efficient_channel_attention.1} parent=0 // pred_region
    _
  $region9: #{efficient_channel_attention.1} parent=0 // pred_fallthru
    _
  %v11 = vld [vmem:[%s1] sm:$0x3f]
  %v12 = vld [vmem:[%s1 + $0x8] sm:$0x3f]
  %v13 = vld [vmem:[%s1 + $0x10] sm:$0x3f]
  %v14 = vld [vmem:[%s1 + $0x18] sm:$0x3f]
  %v15 = vld [vmem:[%s0] sm:$0xff]
  %v16 = vld [vmem:[%s0 + $0x8] sm:$0xff]
  %v17 = vld [vmem:[%s0 + $0x10] sm:$0xff]
  %v18 = vld [vmem:[%s0 + $0x18] sm:$0xff]
  %v19 = vld [vmem:[%s0 + $0x20] sm:$0xff]
  %v20 = vld [vmem:[%s0 + $0x28] sm:$0xff]
  %v21 = vld [vmem:[%s0 + $0x30] sm:$0xff]
  %v22 = vld [vmem:[%s0 + $0x38] sm:$0xff]
  %v23 = vld [vmem:[%s0 + $0x40] sm:$0xff]
  %v24 = vld [vmem:[%s0 + $0x48] sm:$0xff]
  %v25 = vld [vmem:[%s0 + $0x50] sm:$0xff]
  %v26 = vld [vmem:[%s0 + $0x58] sm:$0xff]
  %v27 = vld [vmem:[%s0 + $0x60] sm:$0xff]
  %v28 = vld [vmem:[%s0 + $0x68] sm:$0xff]
  %v29 = vld [vmem:[%s0 + $0x70] sm:$0xff]
  %v30 = vld [vmem:[%s0 + $0x78] sm:$0xff]
  %v31 = vld [vmem:[%s0 + $0x80] sm:$0xff]
  %v32 = vld [vmem:[%s0 + $0x88] sm:$0xff]
  %v33 = vld [vmem:[%s0 + $0x90] sm:$0xff]
  %v34 = vld [vmem:[%s0 + $0x98] sm:$0xff]
  %v35 = vld [vmem:[%s0 + $0xa0] sm:$0xff]
  %v36 = vld [vmem:[%s0 + $0xa8] sm:$0xff]
  %v37 = vld [vmem:[%s0 + $0xb0] sm:$0xff]
  %v38 = vld [vmem:[%s0 + $0xb8] sm:$0xff]
  %v39 = vld [vmem:[%s0 + $0xc0] sm:$0xff]
  %v40 = vld [vmem:[%s0 + $0xc8] sm:$0xff]
  %v41 = vld [vmem:[%s0 + $0xd0] sm:$0xff]
  %v42 = vld [vmem:[%s0 + $0xd8] sm:$0xff]
  %v43 = vld [vmem:[%s0 + $0xe0] sm:$0xff]
  %v44 = vld [vmem:[%s0 + $0xe8] sm:$0xff]
  %v45 = vld [vmem:[%s0 + $0xf0] sm:$0xff]
  %v46 = vld [vmem:[%s0 + $0xf8] sm:$0xff]
  %v47 = vld [vmem:[%s0 + $0x100] sm:$0xff]
  %v48 = vld [vmem:[%s0 + $0x108] sm:$0xff]
  %v49 = vld [vmem:[%s0 + $0x110] sm:$0xff]
  %v50 = vld [vmem:[%s0 + $0x118] sm:$0xff]
  %v51 = vld [vmem:[%s0 + $0x120] sm:$0xff]
  %v52 = vld [vmem:[%s0 + $0x128] sm:$0xff]
  %v53 = vld [vmem:[%s0 + $0x130] sm:$0xff]
  %v54 = vld [vmem:[%s0 + $0x138] sm:$0xff]
  %v55 = vld [vmem:[%s0 + $0x140] sm:$0xff]
  %v56 = vld [vmem:[%s0 + $0x148] sm:$0xff]
  %v57 = vld [vmem:[%s0 + $0x150] sm:$0xff]
  %v58 = vld [vmem:[%s0 + $0x158] sm:$0xff]
  %v59 = vld [vmem:[%s0 + $0x160] sm:$0xff]
  %v60 = vld [vmem:[%s0 + $0x168] sm:$0xff]
  %v61 = vld [vmem:[%s0 + $0x170] sm:$0xff]
  %v62 = vld [vmem:[%s0 + $0x178] sm:$0xff]
  %v63 = vld [vmem:[%s0 + $0x180] sm:$0xff]
  %v64 = vld [vmem:[%s0 + $0x188] sm:$0xff]
  %v65 = vld [vmem:[%s0 + $0x190] sm:$0xff]
  %v66 = vld [vmem:[%s0 + $0x198] sm:$0xff]
  %v67 = vld [vmem:[%s0 + $0x1a0] sm:$0xff]
  %v68 = vld [vmem:[%s0 + $0x1a8] sm:$0xff]
  %v69 = vld [vmem:[%s0 + $0x1b0] sm:$0xff]
  %v70 = vld [vmem:[%s0 + $0x1b8] sm:$0xff]
  %v71 = vld [vmem:[%s0 + $0x1c0] sm:$0xff]
  %v72 = vld [vmem:[%s0 + $0x1c8] sm:$0xff]
  %v73 = vld [vmem:[%s0 + $0x1d0] sm:$0xff]
  %v74 = vld [vmem:[%s0 + $0x1d8] sm:$0xff]
  %v75 = vld [vmem:[%s0 + $0x1e0] sm:$0xff]
  %v76 = vld [vmem:[%s0 + $0x1e8] sm:$0xff]
  %v77 = vld [vmem:[%s0 + $0x1f0] sm:$0xff]
  %v78 = vld [vmem:[%s0 + $0x1f8] sm:$0xff]
  %79 = vmatprep.subr.mxu0 0.0
  %80 = vmatpush1.msra.mxu0 %v15
  %81 = vmatprep.subr.mxu0 0.0
  %82 = vmatpush1.msra.mxu0 %v16
  %83 = vmatprep.subr.mxu0 0.0
  %84 = vmatpush1.msra.mxu0 %v17
  %85 = vmatprep.subr.mxu0 0.0
  %86 = vmatpush1.msra.mxu0 %v18
  %87 = vmatprep.subr.mxu0 0.0
  %88 = vmatpush1.msra.mxu0 %v19
  %89 = vmatprep.subr.mxu0 0.0
  %90 = vmatpush1.msra.mxu0 %v20
  %91 = vmatprep.subr.mxu0 0.0
  %92 = vmatpush1.msra.mxu0 %v21
  %93 = vmatprep.subr.mxu0 0.0
  %94 = vmatpush1.msra.mxu0 %v22
  %95 = vmatprep.subr.mxu0 0.0
  %96 = vmatpush1.msra.mxu0 %v23
  %97 = vmatprep.subr.mxu0 0.0
  %98 = vmatpush1.msra.mxu0 %v24
  %99 = vmatprep.subr.mxu0 0.0
  %100 = vmatpush1.msra.mxu0 %v25
  %101 = vmatprep.subr.mxu0 0.0
  %102 = vmatpush1.msra.mxu0 %v26
  %103 = vmatprep.subr.mxu0 0.0
  %104 = vmatpush1.msra.mxu0 %v27
  %105 = vmatprep.subr.mxu0 0.0
  %106 = vmatpush1.msra.mxu0 %v28
  %107 = vmatprep.subr.mxu0 0.0
  %108 = vmatpush1.msra.mxu0 %v29
  %109 = vmatprep.subr.mxu0 0.0
  %110 = vmatpush1.msra.mxu0 %v30
  %111 = vmatprep.subr.mxu0 0.0
  %112 = vmatpush1.msra.mxu0 %v31
  %113 = vmatprep.subr.mxu0 0.0
  %114 = vmatpush1.msra.mxu0 %v32
  %115 = vmatprep.subr.mxu0 0.0
  %116 = vmatpush1.msra.mxu0 %v33
  %117 = vmatprep.subr.mxu0 0.0
  %118 = vmatpush1.msra.mxu0 %v34
  %119 = vmatprep.subr.mxu0 0.0
  %120 = vmatpush1.msra.mxu0 %v35
  %121 = vmatprep.subr.mxu0 0.0
  %122 = vmatpush1.msra.mxu0 %v36
  %123 = vmatprep.subr.mxu0 0.0
  %124 = vmatpush1.msra.mxu0 %v37
  %125 = vmatprep.subr.mxu0 0.0
  %126 = vmatpush1.msra.mxu0 %v38
  %127 = vmatprep.subr.mxu0 0.0
  %128 = vmatpush1.msra.mxu0 %v39
  %129 = vmatprep.subr.mxu0 0.0
  %130 = vmatpush1.msra.mxu0 %v40
  %131 = vmatprep.subr.mxu0 0.0
  %132 = vmatpush1.msra.mxu0 %v41
  %133 = vmatprep.subr.mxu0 0.0
  %134 = vmatpush1.msra.mxu0 %v42
  %135 = vmatprep.subr.mxu0 0.0
  %136 = vmatpush1.msra.mxu0 %v43
  %137 = vmatprep.subr.mxu0 0.0
  %138 = vmatpush1.msra.mxu0 %v44
  %139 = vmatprep.subr.mxu0 0.0
  %140 = vmatpush1.msra.mxu0 %v45
  %141 = vmatprep.subr.mxu0 0.0
  %142 = vmatpush1.msra.mxu0 %v46
  %143 = vmatprep.mubr.f32.mxu0 %v12
  %144 = vmatmul.mubr.f32.gmra.mrb[0].mxu0 %v11
  %v145 = vpop.f32.mrb[0].mxu0
  %v146 = vadd.f32 0.0, %v145
  %v147 = vpop.f32.mrb[0].mxu0
  %148 = vdwg.mxu0
  %149 = vmatprep.subr.mxu0 0.0
  %150 = vmatpush1.msra.mxu0 %v47
  %151 = vmatprep.subr.mxu0 0.0
  %152 = vmatpush1.msra.mxu0 %v48
  %153 = vmatprep.subr.mxu0 0.0
  %154 = vmatpush1.msra.mxu0 %v49
  %155 = vmatprep.subr.mxu0 0.0
  %156 = vmatpush1.msra.mxu0 %v50
  %157 = vmatprep.subr.mxu0 0.0
  %158 = vmatpush1.msra.mxu0 %v51
  %159 = vmatprep.subr.mxu0 0.0
  %160 = vmatpush1.msra.mxu0 %v52
  %161 = vmatprep.subr.mxu0 0.0
  %162 = vmatpush1.msra.mxu0 %v53
  %163 = vmatprep.subr.mxu0 0.0
  %164 = vmatpush1.msra.mxu0 %v54
  %165 = vmatprep.subr.mxu0 0.0
  %166 = vmatpush1.msra.mxu0 %v55
  %167 = vmatprep.subr.mxu0 0.0
  %168 = vmatpush1.msra.mxu0 %v56
  %169 = vmatprep.subr.mxu0 0.0
  %170 = vmatpush1.msra.mxu0 %v57
  %171 = vmatprep.subr.mxu0 0.0
  %172 = vmatpush1.msra.mxu0 %v58
  %173 = vmatprep.subr.mxu0 0.0
  %174 = vmatpush1.msra.mxu0 %v59
  %175 = vmatprep.subr.mxu0 0.0
  %176 = vmatpush1.msra.mxu0 %v60
  %177 = vmatprep.subr.mxu0 0.0
  %178 = vmatpush1.msra.mxu0 %v61
  %179 = vmatprep.subr.mxu0 0.0
  %180 = vmatpush1.msra.mxu0 %v62
  %181 = vmatprep.subr.mxu0 0.0
  %182 = vmatpush1.msra.mxu0 %v63
  %183 = vmatprep.subr.mxu0 0.0
  %184 = vmatpush1.msra.mxu0 %v64
  %185 = vmatprep.subr.mxu0 0.0
  %186 = vmatpush1.msra.mxu0 %v65
  %187 = vmatprep.subr.mxu0 0.0
  %188 = vmatpush1.msra.mxu0 %v66
  %189 = vmatprep.subr.mxu0 0.0
  %190 = vmatpush1.msra.mxu0 %v67
  %191 = vmatprep.subr.mxu0 0.0
  %192 = vmatpush1.msra.mxu0 %v68
  %193 = vmatprep.subr.mxu0 0.0
  %194 = vmatpush1.msra.mxu0 %v69
  %195 = vmatprep.subr.mxu0 0.0
  %196 = vmatpush1.msra.mxu0 %v70
  %197 = vmatprep.subr.mxu0 0.0
  %198 = vmatpush1.msra.mxu0 %v71
  %199 = vmatprep.subr.mxu0 0.0
  %200 = vmatpush1.msra.mxu0 %v72
  %201 = vmatprep.subr.mxu0 0.0
  %202 = vmatpush1.msra.mxu0 %v73
  %203 = vmatprep.subr.mxu0 0.0
  %204 = vmatpush1.msra.mxu0 %v74
  %205 = vmatprep.subr.mxu0 0.0
  %206 = vmatpush1.msra.mxu0 %v75
  %207 = vmatprep.subr.mxu0 0.0
  %208 = vmatpush1.msra.mxu0 %v76
  %209 = vmatprep.subr.mxu0 0.0
  %210 = vmatpush1.msra.mxu0 %v77
  %211 = vmatprep.subr.mxu0 0.0
  %212 = vmatpush1.msra.mxu0 %v78
  %213 = vmatprep.mubr.f32.mxu0 %v14
  %214 = vmatmul.mubr.f32.gmra.mrb[0].mxu0 %v13
  %v215 = vpop.f32.mrb[0].mxu0
  %v216 = vadd.f32 %v146, %v215
  %v217 = vpop.f32.mrb[0].mxu0
  %218 = vdwg.mxu0
  %v219 = vxor.u32 %v216, 2147483648
  %v220 = vmul.f32 %v219, 1.442695
  %v221 = vpow.pop %v220
  %v222 = vadd.f32 %v221, 1.0
  %v223 = vrcp.pop %v222
  %v224 = vmul.f32 1.0, %v223
  %226 = vset.pattern.permute.xlu0 0
  %227 = vperm.xlu0 %226, %v224
  %v228 = vpop.permute.xlu0 %227
  %v230 = vmul.f32 %v11, %v228
  %vm231 = vcmask 521216
  %232 = vst.msk [vmem:[%s2] sm:$0x3f] %vm231, %v230
  %233 = vset.pattern.permute.xlu0 1
  %234 = vperm.xlu0 %233, %v224
  %v235 = vpop.permute.xlu0 %234
  %v237 = vmul.f32 %v11, %v235
  %vm238 = vcmask 1046016
  %239 = vst.msk [vmem:[%s2] sm:$0x3f] %vm238, %v237
  %240 = vset.pattern.permute.xlu0 2
  %241 = vperm.xlu0 %240, %v224
  %v242 = vpop.permute.xlu0 %241
  %v244 = vmul.f32 %v12, %v242
  %245 = vst.msk [vmem:[%s2 + $0x8] sm:$0x3f] %vm231, %v244
  %246 = vset.pattern.permute.xlu0 3
  %247 = vperm.xlu0 %246, %v224
  %v248 = vpop.permute.xlu0 %247
  %v250 = vmul.f32 %v12, %v248
  %251 = vst.msk [vmem:[%s2 + $0x8] sm:$0x3f] %vm238, %v250
  %252 = vset.pattern.permute.xlu0 4
  %253 = vperm.xlu0 %252, %v224
  %v254 = vpop.permute.xlu0 %253
  %v256 = vmul.f32 %v13, %v254
  %257 = vst.msk [vmem:[%s2 + $0x10] sm:$0x3f] %vm231, %v256
  %258 = vset.pattern.permute.xlu0 5
  %259 = vperm.xlu0 %258, %v224
  %v260 = vpop.permute.xlu0 %259
  %v262 = vmul.f32 %v13, %v260
  %263 = vst.msk [vmem:[%s2 + $0x10] sm:$0x3f] %vm238, %v262
  %264 = vset.pattern.permute.xlu0 6
  %265 = vperm.xlu0 %264, %v224
  %v266 = vpop.permute.xlu0 %265
  %v268 = vmul.f32 %v14, %v266
  %269 = vst.msk [vmem:[%s2 + $0x18] sm:$0x3f] %vm231, %v268
  %270 = vset.pattern.permute.xlu0 7
  %271 = vperm.xlu0 %270, %v224
  %v272 = vpop.permute.xlu0 %271
  %v274 = vmul.f32 %v14, %v272
  %275 = vst.msk [vmem:[%s2 + $0x18] sm:$0x3f] %vm238, %v274
  // Predicated region
  $region10: #{efficient_channel_attention.1} parent=0 // pred_check
    _
  $region11: #{efficient_channel_attention.1} parent=0 // pred_check_branch
    %277 = sbr.rel (0) target = $region13
  $region12: #{efficient_channel_attention.1} parent=0 // pred_region
    _
  $region13: #{efficient_channel_attention.1} parent=0 // pred_fallthru
    _
  // Predicated region
  $region14: #{efficient_channel_attention.1} parent=0 // pred_check
    _
  $region15: #{efficient_channel_attention.1} parent=0 // pred_check_branch
    %279 = sbr.rel (0) target = $region17
  $region16: #{efficient_channel_attention.1} parent=0 // pred_region
    _
  $region17: #{efficient_channel_attention.1} parent=0 // pred_fallthru
    _

</llo_original>
